<compile_context>
chip_gen: v7x
topology: tpu7x:2x2x1
jax: 0.10.0
libtpu: 0.0.40
codegen_flags: <defaults>
</compile_context>

<pallas_src>
import functools

import jax
import jax.numpy as jnp
from jax import lax
from jax.experimental import pallas as pl
from jax.experimental.pallas import tpu as pltpu

BN_EPS = 1e-5


# ------------------------------ fused kernel ------------------------------- #

def _fused_shuffle_unit_kernel(x_ref, w1_ref, s1_ref, b1_ref, wd_ref, sd_ref,
                               bd_ref, w2_ref, s2_ref, b2_ref, o_ref, pad_ref,
                               *, width):
    """One ShuffleUnit (combine='add') for a single batch element.

    Layout: channels on the sublane/matmul axis, flattened H*W on the lane axis.

      x_ref  : (1, Cin, HW)   bf16   input (also the residual)
      w1_ref : (Cb, Cin)      bf16   compress 1x1 (block-diag, shuffle folded)
      s1/b1  : (Cb, 1)        f32    folded BN scale / bias (compress)
      wd_ref : (Cb, 9)        f32    depthwise 3x3 taps, column = kh*3+kw
      sd/bd  : (Cb, 1)        f32    folded BN scale / bias (depthwise)
      w2_ref : (Cout, Cb)     bf16   expand 1x1 (block-diag)
      s2/b2  : (Cout, 1)      f32    folded BN scale / bias (expand)
      o_ref  : (1, Cout, HW)  f32    output
      pad_ref: (Cb, HW + 2*(width+1)) f32 VMEM scratch (zero-padded dw input)
    """
    cb, padded_len = pad_ref.shape
    hw = x_ref.shape[2]
    pad = (padded_len - hw) // 2          # = width + 1

    xb = x_ref[0]                                            # (Cin, HW) bf16

    # ---- grouped 1x1 compress + folded BN + ReLU (+ folded channel_shuffle)
    y = jnp.dot(w1_ref[...], xb, preferred_element_type=jnp.float32)
    y = jnp.maximum(y * s1_ref[...] + b1_ref[...], 0.0)      # (Cb, HW) f32

    # ---- depthwise 3x3 (stride 1, pad 1) on the flattened H*W lane axis ----
    pad_ref[...] = jnp.zeros_like(pad_ref)                   # zero borders
    pad_ref[:, pad:pad + hw] = y

    col = lax.broadcasted_iota(jnp.int32, (cb, hw), 1)
    w_idx = col % width
    mask_l = w_idx >= 1                   # valid lanes when dw == -1
    mask_r = w_idx < (width - 1)          # valid lanes when dw == +1

    acc = jnp.zeros((cb, hw), jnp.float32)
    for k in range(9):                    # fully unrolled 9-tap MAC loop (VPU)
        kh, kw = k // 3, k % 3
        dh, dw = kh - 1, kw - 1
        start = pad + dh * width + dw
        tap = pad_ref[:, start:start + hw]                   # (Cb, HW) f32
        if dw == -1:
            tap = jnp.where(mask_l, tap, 0.0)
        elif dw == 1:
            tap = jnp.where(mask_r, tap, 0.0)
        acc = acc + tap * wd_ref[:, k:k + 1]

    z = acc * sd_ref[...] + bd_ref[...]                      # (Cb, HW) f32

    # ---- grouped 1x1 expand + folded BN, residual add, ReLU ----------------
    out = jnp.dot(w2_ref[...], z.astype(jnp.bfloat16),
                  preferred_element_type=jnp.float32)        # (Cout, HW) f32
    out = out * s2_ref[...] + b2_ref[...]
    out = out + xb.astype(jnp.float32)                       # combine='add'
    o_ref[0] = jnp.maximum(out, 0.0).astype(o_ref.dtype)


# ----------------------------- parameter glue ------------------------------ #

def _bn_params(key, c):
    k1, k2, k3, k4 = jax.random.split(key, 4)
    return dict(
        gamma=jax.random.uniform(k1, (c,), jnp.float32, 0.5, 1.5),
        beta=0.1 * jax.random.normal(k2, (c,), jnp.float32),
        mean=0.1 * jax.random.normal(k3, (c,), jnp.float32),
        var=jax.random.uniform(k4, (c,), jnp.float32, 0.5, 1.5),
    )


def init_params(key, in_channels, out_channels, groups):
    """Deterministic synthetic parameters matching the PyTorch module shapes."""
    cb = out_channels // 4
    ks = jax.random.split(key, 9)
    return dict(
        w1=0.1 * jax.random.normal(ks[0], (cb, in_channels // groups, 1, 1), jnp.float32),
        b1=0.1 * jax.random.normal(ks[1], (cb,), jnp.float32),
        bn1=_bn_params(ks[2], cb),
        wd=0.1 * jax.random.normal(ks[3], (cb, 1, 3, 3), jnp.float32),
        bd=0.1 * jax.random.normal(ks[4], (cb,), jnp.float32),
        bnd=_bn_params(ks[5], cb),
        w2=0.1 * jax.random.normal(ks[6], (out_channels, cb // groups, 1, 1), jnp.float32),
        b2=0.1 * jax.random.normal(ks[7], (out_channels,), jnp.float32),
        bn2=_bn_params(ks[8], out_channels),
    )


def _grouped1x1_to_dense(w, groups):
    """(Cout, Cin//groups, 1, 1) grouped-conv weight -> block-diag (Cin, Cout)."""
    cout, cin_g = w.shape[0], w.shape[1]
    cout_g = cout // groups
    cin = cin_g * groups
    dense = jnp.zeros((cin, cout), w.dtype)
    for g in range(groups):
        blk = w[g * cout_g:(g + 1) * cout_g, :, 0, 0]           # (cout_g, cin_g)
        dense = dense.at[g * cin_g:(g + 1) * cin_g,
                         g * cout_g:(g + 1) * cout_g].set(blk.T)
    return dense


def _fold_bn(conv_bias, gamma, beta, mean, var, eps=BN_EPS):
    s = gamma / jnp.sqrt(var + eps)
    b = (conv_bias - mean) * s + beta
    return s, b


# ------------------------------ Pallas wrapper ------------------------------ #

def shuffle_unit_pallas(x_nchw, params, groups=3):
    n, cin, h, w = x_nchw.shape
    cb = params["w1"].shape[0]
    cout = params["w2"].shape[0]
    assert cin == cout, "combine='add' requires in_channels == out_channels"
    cpg = cb // groups
    hw = h * w

    # compress conv + BN, with channel_shuffle folded into output channel order
    w1 = _grouped1x1_to_dense(params["w1"], groups)             # (Cin, Cb)
    s1, b1 = _fold_bn(params["b1"], **params["bn1"])
    perm = jnp.array([(j % groups) * cpg + (j // groups) for j in range(cb)])
    w1, s1, b1 = w1[:, perm], s1[perm], b1[perm]
    w1t = w1.T.astype(jnp.bfloat16)                             # (Cb, Cin)

    # depthwise conv + BN (kept f32: VPU path, v5e-safe)
    wd = params["wd"][:, 0, :, :].reshape(cb, 9).astype(jnp.float32)
    sd, bd = _fold_bn(params["bd"], **params["bnd"])

    # expand conv + BN
    # TODO(synk): at production channel widths run per-group matmuls instead of
    #             the block-diagonal dense trick (3x fewer MACs / weight bytes).
    w2 = _grouped1x1_to_dense(params["w2"], groups)             # (Cb, Cout)
    s2, b2 = _fold_bn(params["b2"], **params["bn2"])
    w2t = w2.T.astype(jnp.bfloat16)                             # (Cout, Cb)

    # lane-dense activation layout (N, C, H*W): pure reshape of NCHW, no
    # transpose passes over HBM.
    x_flat = x_nchw.reshape(n, cin, hw).astype(jnp.bfloat16)

    kernel = functools.partial(_fused_shuffle_unit_kernel, width=w)
    const2 = lambda i: (0, 0)

    out_flat = pl.pallas_call(
        kernel,
        out_shape=jax.ShapeDtypeStruct((n, cout, hw), jnp.float32),
        grid=(n,),
        in_specs=[
            pl.BlockSpec((1, cin, hw), lambda i: (i, 0, 0)),    # x (+residual)
            pl.BlockSpec((cb, cin), const2),                    # w1t (bf16)
            pl.BlockSpec((cb, 1), const2),                      # s1
            pl.BlockSpec((cb, 1), const2),                      # b1
            pl.BlockSpec((cb, 9), const2),                      # wd
            pl.BlockSpec((cb, 1), const2),                      # sd
            pl.BlockSpec((cb, 1), const2),                      # bd
            pl.BlockSpec((cout, cb), const2),                   # w2t (bf16)
            pl.BlockSpec((cout, 1), const2),                    # s2
            pl.BlockSpec((cout, 1), const2),                    # b2
        ],
        out_specs=pl.BlockSpec((1, cout, hw), lambda i: (i, 0, 0)),
        scratch_shapes=[pltpu.VMEM((cb, hw + 2 * (w + 1)), jnp.float32)],
        compiler_params=pltpu.CompilerParams(
            dimension_semantics=("parallel",),
            vmem_limit_bytes=32 * 1024 * 1024),
    )(x_flat, w1t,
      s1.reshape(cb, 1), b1.reshape(cb, 1),
      wd,
      sd.reshape(cb, 1), bd.reshape(cb, 1),
      w2t,
      s2.reshape(cout, 1), b2.reshape(cout, 1))

    return out_flat.reshape(n, cout, h, w)                      # back to NCHW


# --------------------------- pure-JAX reference ----------------------------- #

def reference_forward(x, params, groups=3):
    """NCHW reference mirroring the PyTorch forward (eval-mode BN), f32."""
    def conv2d(x, w, b, stride=1, padding=0, fgc=1):
        out = lax.conv_general_dilated(
            x, w, (stride, stride), [(padding, padding)] * 2,
            dimension_numbers=("NCHW", "OIHW", "NCHW"),
            feature_group_count=fgc)
        return out + b[None, :, None, None]

    def bn(x, gamma, beta, mean, var):
        inv = gamma / jnp.sqrt(var + BN_EPS)
        return ((x - mean[None, :, None, None]) * inv[None, :, None, None]
                + beta[None, :, None, None])

    cb = params["w1"].shape[0]
    out = conv2d(x, params["w1"], params["b1"], fgc=groups)
    out = jnp.maximum(bn(out, **params["bn1"]), 0.0)
    n, c, h, w = out.shape
    out = out.reshape(n, groups, c // groups, h, w)
    out = out.transpose(0, 2, 1, 3, 4).reshape(n, c, h, w)       # channel_shuffle
    out = conv2d(out, params["wd"], params["bd"], stride=1, padding=1, fgc=cb)
    out = bn(out, **params["bnd"])
    out = conv2d(out, params["w2"], params["b2"], fgc=groups)
    out = bn(out, **params["bn2"])
    return jnp.maximum(x + out, 0.0)                             # combine='add'


# ---------------------------------- main ------------------------------------ #

if __name__ == "__main__":
    # combine='add' requires in_channels == out_channels; groups=3 -> Cin%3==0,
    # bottleneck = out_channels // 4 must also be divisible by groups.
    N, C, H, W = 2, 24, 16, 16
    GROUPS = 3

    key = jax.random.PRNGKey(0)
    kx, kp = jax.random.split(key)
    x = jax.random.normal(kx, (N, C, H, W), jnp.float32)
    params = init_params(kp, C, C, GROUPS)

    out = jax.block_until_ready(shuffle_unit_pallas(x, params, groups=GROUPS))

    ref = reference_forward(x, params, groups=GROUPS)
    assert out.shape == ref.shape == (N, C, H, W)
    max_err = float(jnp.max(jnp.abs(out - ref)))
    # bf16 activations / matmul weights (f32 accumulation) => small drift vs
    # the pure-f32 reference is expected; a real bug (wrong shuffle, tap or
    # mask) produces errors >= O(0.1).
    if max_err > 5e-2:
        raise AssertionError(f"Pallas output mismatch vs reference: {max_err}")

    print("KERNEL_OK")
</pallas_src>

<mosaic_0001>
module attributes {stable_mosaic.version = 11 : i64} {
  func.func @_fused_shuffle_unit_kernel(%arg0: i32, %arg1: memref<1x24x256xbf16, #tpu.memory_space<vmem>>, %arg2: memref<6x24xbf16, #tpu.memory_space<vmem>>, %arg3: memref<6x1xf32, #tpu.memory_space<vmem>>, %arg4: memref<6x1xf32, #tpu.memory_space<vmem>>, %arg5: memref<6x9xf32, #tpu.memory_space<vmem>>, %arg6: memref<6x1xf32, #tpu.memory_space<vmem>>, %arg7: memref<6x1xf32, #tpu.memory_space<vmem>>, %arg8: memref<24x6xbf16, #tpu.memory_space<vmem>>, %arg9: memref<24x1xf32, #tpu.memory_space<vmem>>, %arg10: memref<24x1xf32, #tpu.memory_space<vmem>>, %arg11: memref<1x24x256xf32, #tpu.memory_space<vmem>>, %arg12: memref<6x290xf32, #tpu.memory_space<vmem>>) attributes {dimension_semantics = [#tpu.dimension_semantics<parallel>], iteration_bounds = array<i64: 2>, scalar_prefetch = 0 : i64, scratch_operands = 1 : i64, tpu.core_type = #tpu.core_type<tc>, window_params = [{transform_indices = @transform_0, window_bounds = array<i64: 1, 24, 256>}, {pipeline_mode = #tpu.pipeline_mode<synchronous>, transform_indices = @transform_1, window_bounds = array<i64: 6, 24>}, {pipeline_mode = #tpu.pipeline_mode<synchronous>, transform_indices = @transform_2, window_bounds = array<i64: 6, 1>}, {pipeline_mode = #tpu.pipeline_mode<synchronous>, transform_indices = @transform_3, window_bounds = array<i64: 6, 1>}, {pipeline_mode = #tpu.pipeline_mode<synchronous>, transform_indices = @transform_4, window_bounds = array<i64: 6, 9>}, {pipeline_mode = #tpu.pipeline_mode<synchronous>, transform_indices = @transform_5, window_bounds = array<i64: 6, 1>}, {pipeline_mode = #tpu.pipeline_mode<synchronous>, transform_indices = @transform_6, window_bounds = array<i64: 6, 1>}, {pipeline_mode = #tpu.pipeline_mode<synchronous>, transform_indices = @transform_7, window_bounds = array<i64: 24, 6>}, {pipeline_mode = #tpu.pipeline_mode<synchronous>, transform_indices = @transform_8, window_bounds = array<i64: 24, 1>}, {pipeline_mode = #tpu.pipeline_mode<synchronous>, transform_indices = @transform_9, window_bounds = array<i64: 24, 1>}, {transform_indices = @transform_10, window_bounds = array<i64: 1, 24, 256>}]} {
    %c0 = arith.constant 0 : index
    %c0_0 = arith.constant 0 : index
    %c0_1 = arith.constant 0 : index
    %0 = vector.load %arg1[%c0, %c0_0, %c0_1] : memref<1x24x256xbf16, #tpu.memory_space<vmem>>, vector<1x24x256xbf16>
    %1 = vector.shape_cast %0 : vector<1x24x256xbf16> to vector<24x256xbf16>
    %c0_2 = arith.constant 0 : index
    %c0_3 = arith.constant 0 : index
    %2 = vector.load %arg2[%c0_2, %c0_3] : memref<6x24xbf16, #tpu.memory_space<vmem>>, vector<6x24xbf16>
    %cst = arith.constant dense<0.000000e+00> : vector<6x256xf32>
    %3 = tpu.matmul %2, %1, %cst {dimension_numbers = #tpu.dot_dimension_numbers<[1], [0], [0], [1], [0, 0, 1, 1], [], []>} : vector<6x24xbf16>, vector<24x256xbf16>, vector<6x256xf32> -> vector<6x256xf32>
    %c0_4 = arith.constant 0 : index
    %c0_5 = arith.constant 0 : index
    %4 = vector.load %arg3[%c0_4, %c0_5] : memref<6x1xf32, #tpu.memory_space<vmem>>, vector<6x1xf32>
    %5 = vector.broadcast %4 : vector<6x1xf32> to vector<6x256xf32>
    %6 = arith.mulf %3, %5 : vector<6x256xf32>
    %c0_6 = arith.constant 0 : index
    %c0_7 = arith.constant 0 : index
    %7 = vector.load %arg4[%c0_6, %c0_7] : memref<6x1xf32, #tpu.memory_space<vmem>>, vector<6x1xf32>
    %8 = vector.broadcast %7 : vector<6x1xf32> to vector<6x256xf32>
    %9 = arith.addf %6, %8 : vector<6x256xf32>
    %cst_8 = arith.constant 0.000000e+00 : f32
    %10 = vector.broadcast %cst_8 : f32 to vector<6x256xf32>
    %11 = arith.maximumf %9, %10 : vector<6x256xf32>
    %cst_9 = arith.constant 0.000000e+00 : f32
    %12 = vector.broadcast %cst_9 : f32 to vector<6x290xf32>
    %c0_10 = arith.constant 0 : index
    %c0_11 = arith.constant 0 : index
    %13 = vector.load %arg12[%c0_10, %c0_11] : memref<6x290xf32, #tpu.memory_space<vmem>>, vector<6x290xf32>
    tpu.vector_store %arg12[%c0_10, %c0_11], %12 {strides = array<i32>} : memref<6x290xf32, #tpu.memory_space<vmem>>, vector<6x290xf32>,
    %c0_12 = arith.constant 0 : index
    %c17 = arith.constant 17 : index
    %14 = vector.load %arg12[%c0_12, %c17] : memref<6x290xf32, #tpu.memory_space<vmem>>, vector<6x256xf32>
    tpu.vector_store %arg12[%c0_12, %c17], %11 {strides = array<i32>} : memref<6x290xf32, #tpu.memory_space<vmem>>, vector<6x256xf32>,
    %15 = tpu.iota {dimensions = array<i32: 1>} : vector<6x256xi32>
    %c16_i32 = arith.constant 16 : i32
    %c0_i32 = arith.constant 0 : i32
    %16 = arith.cmpi eq, %c16_i32, %c0_i32 : i32
    %c1_i32 = arith.constant 1 : i32
    %17 = arith.select %16, %c1_i32, %c16_i32 : i32
    %18 = vector.broadcast %17 : i32 to vector<6x256xi32>
    %19 = arith.remsi %15, %18 : vector<6x256xi32>
    %c0_i32_13 = arith.constant 0 : i32
    %20 = vector.broadcast %c0_i32_13 : i32 to vector<6x256xi32>
    %21 = arith.cmpi ne, %19, %20 : vector<6x256xi32>
    %c0_i32_14 = arith.constant 0 : i32
    %22 = vector.broadcast %c0_i32_14 : i32 to vector<6x256xi32>
    %23 = arith.cmpi slt, %19, %22 : vector<6x256xi32>
    %c0_i32_15 = arith.constant 0 : i32
    %24 = arith.cmpi slt, %17, %c0_i32_15 : i32
    %25 = vector.broadcast %24 : i1 to vector<6x256xi1>
    %26 = vector.broadcast %25 : vector<6x256xi1> to vector<6x256xi1>
    %27 = arith.xori %23, %26 : vector<6x256xi1>
    %28 = arith.andi %27, %21 : vector<6x256xi1>
    %29 = vector.broadcast %17 : i32 to vector<6x256xi32>
    %30 = arith.addi %19, %29 : vector<6x256xi32>
    %31 = arith.select %28, %30, %19 : vector<6x256xi1>, vector<6x256xi32>
    %c1_i32_16 = arith.constant 1 : i32
    %32 = vector.broadcast %c1_i32_16 : i32 to vector<6x256xi32>
    %33 = arith.cmpi sge, %31, %32 : vector<6x256xi32>
    %c15_i32 = arith.constant 15 : i32
    %34 = vector.broadcast %c15_i32 : i32 to vector<6x256xi32>
    %35 = arith.cmpi slt, %31, %34 : vector<6x256xi32>
    %cst_17 = arith.constant 0.000000e+00 : f32
    %36 = vector.broadcast %cst_17 : f32 to vector<6x256xf32>
    %c0_18 = arith.constant 0 : index
    %c0_19 = arith.constant 0 : index
    %37 = vector.load %arg12[%c0_18, %c0_19] : memref<6x290xf32, #tpu.memory_space<vmem>>, vector<6x256xf32>
    %cst_20 = arith.constant 0.000000e+00 : f32
    %38 = vector.broadcast %cst_20 : f32 to vector<6x256xf32>
    %39 = arith.select %33, %37, %38 : vector<6x256xi1>, vector<6x256xf32>
    %c0_21 = arith.constant 0 : index
    %c0_22 = arith.constant 0 : index
    %40 = vector.load %arg5[%c0_21, %c0_22] : memref<6x9xf32, #tpu.memory_space<vmem>>, vector<6x1xf32>
    %41 = vector.broadcast %40 : vector<6x1xf32> to vector<6x256xf32>
    %42 = arith.mulf %39, %41 : vector<6x256xf32>
    %43 = arith.addf %36, %42 : vector<6x256xf32>
    %c0_23 = arith.constant 0 : index
    %c1 = arith.constant 1 : index
    %44 = vector.load %arg12[%c0_23, %c1] : memref<6x290xf32, #tpu.memory_space<vmem>>, vector<6x256xf32>
    %c0_24 = arith.constant 0 : index
    %c1_25 = arith.constant 1 : index
    %45 = vector.load %arg5[%c0_24, %c1_25] : memref<6x9xf32, #tpu.memory_space<vmem>>, vector<6x1xf32>
    %46 = vector.broadcast %45 : vector<6x1xf32> to vector<6x256xf32>
    %47 = arith.mulf %44, %46 : vector<6x256xf32>
    %48 = arith.addf %43, %47 : vector<6x256xf32>
    %c0_26 = arith.constant 0 : index
    %c2 = arith.constant 2 : index
    %49 = vector.load %arg12[%c0_26, %c2] : memref<6x290xf32, #tpu.memory_space<vmem>>, vector<6x256xf32>
    %cst_27 = arith.constant 0.000000e+00 : f32
    %50 = vector.broadcast %cst_27 : f32 to vector<6x256xf32>
    %51 = arith.select %35, %49, %50 : vector<6x256xi1>, vector<6x256xf32>
    %c0_28 = arith.constant 0 : index
    %c2_29 = arith.constant 2 : index
    %52 = vector.load %arg5[%c0_28, %c2_29] : memref<6x9xf32, #tpu.memory_space<vmem>>, vector<6x1xf32>
    %53 = vector.broadcast %52 : vector<6x1xf32> to vector<6x256xf32>
    %54 = arith.mulf %51, %53 : vector<6x256xf32>
    %55 = arith.addf %48, %54 : vector<6x256xf32>
    %c0_30 = arith.constant 0 : index
    %c16 = arith.constant 16 : index
    %56 = vector.load %arg12[%c0_30, %c16] : memref<6x290xf32, #tpu.memory_space<vmem>>, vector<6x256xf32>
    %cst_31 = arith.constant 0.000000e+00 : f32
    %57 = vector.broadcast %cst_31 : f32 to vector<6x256xf32>
    %58 = arith.select %33, %56, %57 : vector<6x256xi1>, vector<6x256xf32>
    %c0_32 = arith.constant 0 : index
    %c3 = arith.constant 3 : index
    %59 = vector.load %arg5[%c0_32, %c3] : memref<6x9xf32, #tpu.memory_space<vmem>>, vector<6x1xf32>
    %60 = vector.broadcast %59 : vector<6x1xf32> to vector<6x256xf32>
    %61 = arith.mulf %58, %60 : vector<6x256xf32>
    %62 = arith.addf %55, %61 : vector<6x256xf32>
    %c0_33 = arith.constant 0 : index
    %c17_34 = arith.constant 17 : index
    %63 = vector.load %arg12[%c0_33, %c17_34] : memref<6x290xf32, #tpu.memory_space<vmem>>, vector<6x256xf32>
    %c0_35 = arith.constant 0 : index
    %c4 = arith.constant 4 : index
    %64 = vector.load %arg5[%c0_35, %c4] : memref<6x9xf32, #tpu.memory_space<vmem>>, vector<6x1xf32>
    %65 = vector.broadcast %64 : vector<6x1xf32> to vector<6x256xf32>
    %66 = arith.mulf %63, %65 : vector<6x256xf32>
    %67 = arith.addf %62, %66 : vector<6x256xf32>
    %c0_36 = arith.constant 0 : index
    %c18 = arith.constant 18 : index
    %68 = vector.load %arg12[%c0_36, %c18] : memref<6x290xf32, #tpu.memory_space<vmem>>, vector<6x256xf32>
    %cst_37 = arith.constant 0.000000e+00 : f32
    %69 = vector.broadcast %cst_37 : f32 to vector<6x256xf32>
    %70 = arith.select %35, %68, %69 : vector<6x256xi1>, vector<6x256xf32>
    %c0_38 = arith.constant 0 : index
    %c5 = arith.constant 5 : index
    %71 = vector.load %arg5[%c0_38, %c5] : memref<6x9xf32, #tpu.memory_space<vmem>>, vector<6x1xf32>
    %72 = vector.broadcast %71 : vector<6x1xf32> to vector<6x256xf32>
    %73 = arith.mulf %70, %72 : vector<6x256xf32>
    %74 = arith.addf %67, %73 : vector<6x256xf32>
    %c0_39 = arith.constant 0 : index
    %c32 = arith.constant 32 : index
    %75 = vector.load %arg12[%c0_39, %c32] : memref<6x290xf32, #tpu.memory_space<vmem>>, vector<6x256xf32>
    %cst_40 = arith.constant 0.000000e+00 : f32
    %76 = vector.broadcast %cst_40 : f32 to vector<6x256xf32>
    %77 = arith.select %33, %75, %76 : vector<6x256xi1>, vector<6x256xf32>
    %c0_41 = arith.constant 0 : index
    %c6 = arith.constant 6 : index
    %78 = vector.load %arg5[%c0_41, %c6] : memref<6x9xf32, #tpu.memory_space<vmem>>, vector<6x1xf32>
    %79 = vector.broadcast %78 : vector<6x1xf32> to vector<6x256xf32>
    %80 = arith.mulf %77, %79 : vector<6x256xf32>
    %81 = arith.addf %74, %80 : vector<6x256xf32>
    %c0_42 = arith.constant 0 : index
    %c33 = arith.constant 33 : index
    %82 = vector.load %arg12[%c0_42, %c33] : memref<6x290xf32, #tpu.memory_space<vmem>>, vector<6x256xf32>
    %c0_43 = arith.constant 0 : index
    %c7 = arith.constant 7 : index
    %83 = vector.load %arg5[%c0_43, %c7] : memref<6x9xf32, #tpu.memory_space<vmem>>, vector<6x1xf32>
    %84 = vector.broadcast %83 : vector<6x1xf32> to vector<6x256xf32>
    %85 = arith.mulf %82, %84 : vector<6x256xf32>
    %86 = arith.addf %81, %85 : vector<6x256xf32>
    %c0_44 = arith.constant 0 : index
    %c34 = arith.constant 34 : index
    %87 = vector.load %arg12[%c0_44, %c34] : memref<6x290xf32, #tpu.memory_space<vmem>>, vector<6x256xf32>
    %cst_45 = arith.constant 0.000000e+00 : f32
    %88 = vector.broadcast %cst_45 : f32 to vector<6x256xf32>
    %89 = arith.select %35, %87, %88 : vector<6x256xi1>, vector<6x256xf32>
    %c0_46 = arith.constant 0 : index
    %c8 = arith.constant 8 : index
    %90 = vector.load %arg5[%c0_46, %c8] : memref<6x9xf32, #tpu.memory_space<vmem>>, vector<6x1xf32>
    %91 = vector.broadcast %90 : vector<6x1xf32> to vector<6x256xf32>
    %92 = arith.mulf %89, %91 : vector<6x256xf32>
    %93 = arith.addf %86, %92 : vector<6x256xf32>
    %c0_47 = arith.constant 0 : index
    %c0_48 = arith.constant 0 : index
    %94 = vector.load %arg6[%c0_47, %c0_48] : memref<6x1xf32, #tpu.memory_space<vmem>>, vector<6x1xf32>
    %95 = vector.broadcast %94 : vector<6x1xf32> to vector<6x256xf32>
    %96 = arith.mulf %93, %95 : vector<6x256xf32>
    %c0_49 = arith.constant 0 : index
    %c0_50 = arith.constant 0 : index
    %97 = vector.load %arg7[%c0_49, %c0_50] : memref<6x1xf32, #tpu.memory_space<vmem>>, vector<6x1xf32>
    %98 = vector.broadcast %97 : vector<6x1xf32> to vector<6x256xf32>
    %99 = arith.addf %96, %98 : vector<6x256xf32>
    %c0_51 = arith.constant 0 : index
    %c0_52 = arith.constant 0 : index
    %100 = vector.load %arg8[%c0_51, %c0_52] : memref<24x6xbf16, #tpu.memory_space<vmem>>, vector<24x6xbf16>
    %101 = arith.truncf %99 : vector<6x256xf32> to vector<6x256xbf16>
    %cst_53 = arith.constant dense<0.000000e+00> : vector<24x256xf32>
    %102 = tpu.matmul %100, %101, %cst_53 {dimension_numbers = #tpu.dot_dimension_numbers<[1], [0], [0], [1], [0, 0, 1, 1], [], []>} : vector<24x6xbf16>, vector<6x256xbf16>, vector<24x256xf32> -> vector<24x256xf32>
    %c0_54 = arith.constant 0 : index
    %c0_55 = arith.constant 0 : index
    %103 = vector.load %arg9[%c0_54, %c0_55] : memref<24x1xf32, #tpu.memory_space<vmem>>, vector<24x1xf32>
    %104 = vector.broadcast %103 : vector<24x1xf32> to vector<24x256xf32>
    %105 = arith.mulf %102, %104 : vector<24x256xf32>
    %c0_56 = arith.constant 0 : index
    %c0_57 = arith.constant 0 : index
    %106 = vector.load %arg10[%c0_56, %c0_57] : memref<24x1xf32, #tpu.memory_space<vmem>>, vector<24x1xf32>
    %107 = vector.broadcast %106 : vector<24x1xf32> to vector<24x256xf32>
    %108 = arith.addf %105, %107 : vector<24x256xf32>
    %109 = arith.extf %1 : vector<24x256xbf16> to vector<24x256xf32>
    %110 = arith.addf %108, %109 : vector<24x256xf32>
    %cst_58 = arith.constant 0.000000e+00 : f32
    %111 = vector.broadcast %cst_58 : f32 to vector<24x256xf32>
    %112 = arith.maximumf %110, %111 : vector<24x256xf32>
    %c0_59 = arith.constant 0 : index
    %c0_60 = arith.constant 0 : index
    %c0_61 = arith.constant 0 : index
    %113 = vector.load %arg11[%c0_59, %c0_60, %c0_61] : memref<1x24x256xf32, #tpu.memory_space<vmem>>, vector<1x24x256xf32>
    %114 = vector.shape_cast %113 : vector<1x24x256xf32> to vector<24x256xf32>
    %115 = vector.shape_cast %112 : vector<24x256xf32> to vector<1x24x256xf32>
    tpu.vector_store %arg11[%c0_59, %c0_60, %c0_61], %115 {strides = array<i32>} : memref<1x24x256xf32, #tpu.memory_space<vmem>>, vector<1x24x256xf32>,
    return
  }
  func.func @transform_0(%arg0: i32) -> (i32, i32, i32) {
    %c0_i32 = arith.constant 0 : i32
    %c0_i32_0 = arith.constant 0 : i32
    %c0_i32_1 = arith.constant 0 : i32
    return %arg0, %c0_i32, %c0_i32_0 : i32, i32, i32
  }
  func.func @transform_1(%arg0: i32) -> (i32, i32) {
    %c0_i32 = arith.constant 0 : i32
    %c0_i32_0 = arith.constant 0 : i32
    %c0_i32_1 = arith.constant 0 : i32
    return %c0_i32, %c0_i32_0 : i32, i32
  }
  func.func @transform_2(%arg0: i32) -> (i32, i32) {
    %c0_i32 = arith.constant 0 : i32
    %c0_i32_0 = arith.constant 0 : i32
    %c0_i32_1 = arith.constant 0 : i32
    return %c0_i32, %c0_i32_0 : i32, i32
  }
  func.func @transform_3(%arg0: i32) -> (i32, i32) {
    %c0_i32 = arith.constant 0 : i32
    %c0_i32_0 = arith.constant 0 : i32
    %c0_i32_1 = arith.constant 0 : i32
    return %c0_i32, %c0_i32_0 : i32, i32
  }
  func.func @transform_4(%arg0: i32) -> (i32, i32) {
    %c0_i32 = arith.constant 0 : i32
    %c0_i32_0 = arith.constant 0 : i32
    %c0_i32_1 = arith.constant 0 : i32
    return %c0_i32, %c0_i32_0 : i32, i32
  }
  func.func @transform_5(%arg0: i32) -> (i32, i32) {
    %c0_i32 = arith.constant 0 : i32
    %c0_i32_0 = arith.constant 0 : i32
    %c0_i32_1 = arith.constant 0 : i32
    return %c0_i32, %c0_i32_0 : i32, i32
  }
  func.func @transform_6(%arg0: i32) -> (i32, i32) {
    %c0_i32 = arith.constant 0 : i32
    %c0_i32_0 = arith.constant 0 : i32
    %c0_i32_1 = arith.constant 0 : i32
    return %c0_i32, %c0_i32_0 : i32, i32
  }
  func.func @transform_7(%arg0: i32) -> (i32, i32) {
    %c0_i32 = arith.constant 0 : i32
    %c0_i32_0 = arith.constant 0 : i32
    %c0_i32_1 = arith.constant 0 : i32
    return %c0_i32, %c0_i32_0 : i32, i32
  }
  func.func @transform_8(%arg0: i32) -> (i32, i32) {
    %c0_i32 = arith.constant 0 : i32
    %c0_i32_0 = arith.constant 0 : i32
    %c0_i32_1 = arith.constant 0 : i32
    return %c0_i32, %c0_i32_0 : i32, i32
  }
  func.func @transform_9(%arg0: i32) -> (i32, i32) {
    %c0_i32 = arith.constant 0 : i32
    %c0_i32_0 = arith.constant 0 : i32
    %c0_i32_1 = arith.constant 0 : i32
    return %c0_i32, %c0_i32_0 : i32, i32
  }
  func.func @transform_10(%arg0: i32) -> (i32, i32, i32) {
    %c0_i32 = arith.constant 0 : i32
    %c0_i32_0 = arith.constant 0 : i32
    %c0_i32_1 = arith.constant 0 : i32
    return %arg0, %c0_i32, %c0_i32_0 : i32, i32, i32
  }
}

</mosaic_0001>

<llo_original>
// kernel: tpu_custom_call.1
$region0: #{tpu_custom_call.1}
  #allocation0 [shape = 'u32[]', space=smem, size = 0x4, offset = 0x4, fixed_abs, tag = 'smem constant byte address 0x4 - core index']
  #allocation1 [shape = 'u32[144,128]{1,0:T(1,128)}', space=vmem, size = 0x12000, scoped, tag = 'internal scratch']
  #allocation2 [shape = 'f32[6,290]{1,0:T(8,128)}', space=vmem, size = 0x3000, scoped, tag = 'scratch operand']
  %s0 = inlined_call_operand.vmem [shape: bf16[2,24,256], index: 0, kind: input, shape index: {}]
  %s1 = inlined_call_operand.vmem [shape: bf16[6,24], index: 1, kind: input, shape index: {}]
  %s2 = inlined_call_operand.vmem [shape: f32[6,1], index: 2, kind: input, shape index: {}]
  %s3 = inlined_call_operand.vmem [shape: f32[6,1], index: 3, kind: input, shape index: {}]
  %s4 = inlined_call_operand.vmem [shape: f32[6,9], index: 4, kind: input, shape index: {}]
  %s5 = inlined_call_operand.vmem [shape: f32[6,1], index: 5, kind: input, shape index: {}]
  %s6 = inlined_call_operand.vmem [shape: f32[6,1], index: 6, kind: input, shape index: {}]
  %s7 = inlined_call_operand.vmem [shape: bf16[24,6], index: 7, kind: input, shape index: {}]
  %s8 = inlined_call_operand.vmem [shape: f32[24,1], index: 8, kind: input, shape index: {}]
  %s9 = inlined_call_operand.vmem [shape: f32[24,1], index: 9, kind: input, shape index: {}]
  %s10 = inlined_call_operand.hbm [shape: f32[2,24,256], index: 10, kind: output, shape index: {}]
  %s11 = sld [smem:[#allocation0]]
  $region73: #{tpu_custom_call.1} parent=0
    _
  %s13 = ssub.s32 1, %s11
  %s14 = scalar_select 0, %s13, %s11
  $region1: #{tpu_custom_call.1} parent=0
    #allocation3 [shape = 'u8[49152]{0}', space=vmem, size = 0xc000, scoped, tag = 'output window, operand 0']
    #allocation4 [shape = 's32[2]{0}', space=sflag, size = 0x8, scoped, tag = 'scoped memory for tpu_custom_call.1']
    %15 = vsyncpa [#allocation4], 0
    %s16 = scalar_lea.sflag [#allocation4], 1
    %17 = vsyncpa %s16, 0
    loop: start=0, step=1, limit=4
    $region2: #{tpu_custom_call.1} parent=1 // loop_pre_header
      _
    $region3: #{tpu_custom_call.1} parent=1 // loop_header
      %s19 = sphi 0, %s23
      %p20 = scmp.ge.s32.totalorder %s19, 4
      %s29 = sphi 0, %s31
      %s32 = sphi 0, %s29
      %s33 = sphi 0, %s32
      %s49 = sphi 0, %s33
      %s53 = sphi 0, %s53
      %s55 = sphi 0, %s53
      %s56 = sphi 0, %s55
      %s70 = sphi 0, %s56
      %s74 = sphi 0, %s74
      %s76 = sphi 0, %s74
      %s77 = sphi 0, %s76
      %s91 = sphi 0, %s77
      %s95 = sphi 0, %s95
      %s97 = sphi 0, %s95
      %s98 = sphi 0, %s97
      %s112 = sphi 0, %s98
      %s116 = sphi 0, %s116
      %s118 = sphi 0, %s116
      %s119 = sphi 0, %s118
      %s133 = sphi 0, %s119
      %s137 = sphi 0, %s137
      %s139 = sphi 0, %s137
      %s140 = sphi 0, %s139
      %s154 = sphi 0, %s140
      %s158 = sphi 0, %s158
      %s160 = sphi 0, %s158
      %s161 = sphi 0, %s160
      %s175 = sphi 0, %s161
      %s179 = sphi 0, %s179
      %s181 = sphi 0, %s179
      %s182 = sphi 0, %s181
      %s196 = sphi 0, %s182
      %s200 = sphi 0, %s200
      %s202 = sphi 0, %s200
      %s203 = sphi 0, %s202
      %s217 = sphi 0, %s203
      %s221 = sphi 0, %s221
      %s223 = sphi 0, %s221
      %s224 = sphi 0, %s223
      %s238 = sphi 0, %s224
      %s244 = sphi 0, %s246
      %s247 = sphi 0, %s244
      %s248 = sphi 0, %s247
      %s264 = sphi 0, %s248
    $region4: #{tpu_custom_call.1} parent=1 // loop_header_branch
      %22 = sbr.rel (%p20) target = $region8
    $region5: #{tpu_custom_call.1} parent=1 // loop_body
      %s24 = ssub.s32 %s19, 1
      %s25 = ssub.s32 %s19, 2
      %s26 = sadd.s32 %s19, 1
      %s27 = ssub.s32 %s19, %s26
      %p28 = scmp.eq.s32.totalorder %s27, 0
      %s30 = sadd.s32 %s29, 1
      %s31 = scalar_select %p28, %s29, %s30
      %p34 = pneg %p28
      %p35 = scmp.eq.s32.totalorder %s19, 1
      %p36 = por %p34, %p35
      %p37 = scmp.ne.s32.totalorder %s29, %s32
      %p38 = scmp.eq.s32.totalorder %s19, 0
      %p39 = por %p37, %p38
      %p40 = scmp.ne.s32.totalorder %s29, %s32
      %p41 = scmp.eq.s32.totalorder %s24, 1
      %p42 = por %p40, %p41
      %p43 = scmp.ne.s32.totalorder %s32, %s33
      %p44 = scmp.eq.s32.totalorder %s24, 0
      %p45 = por %p43, %p44
      %p46 = scmp.ne.s32.totalorder %s32, %s33
      %p47 = scmp.eq.s32.totalorder %s25, 1
      %p48 = por %p46, %p47
      %p50 = scmp.ne.s32.totalorder %s33, %s49
      %p51 = scmp.eq.s32.totalorder %s25, 0
      %p52 = por %p50, %p51
      %s54 = sadd.s32 %s53, 1
      %p57 = scmp.eq.s32.totalorder %s19, 1
      %p58 = scmp.ne.s32.totalorder %s53, %s55
      %p59 = scmp.eq.s32.totalorder %s19, 0
      %p60 = por %p58, %p59
      %p61 = scmp.ne.s32.totalorder %s53, %s55
      %p62 = scmp.eq.s32.totalorder %s24, 1
      %p63 = por %p61, %p62
      %p64 = scmp.ne.s32.totalorder %s55, %s56
      %p65 = scmp.eq.s32.totalorder %s24, 0
      %p66 = por %p64, %p65
      %p67 = scmp.ne.s32.totalorder %s55, %s56
      %p68 = scmp.eq.s32.totalorder %s25, 1
      %p69 = por %p67, %p68
      %p71 = scmp.ne.s32.totalorder %s56, %s70
      %p72 = scmp.eq.s32.totalorder %s25, 0
      %p73 = por %p71, %p72
      %s75 = sadd.s32 %s74, 1
      %p78 = scmp.eq.s32.totalorder %s19, 1
      %p79 = scmp.ne.s32.totalorder %s74, %s76
      %p80 = scmp.eq.s32.totalorder %s19, 0
      %p81 = por %p79, %p80
      %p82 = scmp.ne.s32.totalorder %s74, %s76
      %p83 = scmp.eq.s32.totalorder %s24, 1
      %p84 = por %p82, %p83
      %p85 = scmp.ne.s32.totalorder %s76, %s77
      %p86 = scmp.eq.s32.totalorder %s24, 0
      %p87 = por %p85, %p86
      %p88 = scmp.ne.s32.totalorder %s76, %s77
      %p89 = scmp.eq.s32.totalorder %s25, 1
      %p90 = por %p88, %p89
      %p92 = scmp.ne.s32.totalorder %s77, %s91
      %p93 = scmp.eq.s32.totalorder %s25, 0
      %p94 = por %p92, %p93
      %s96 = sadd.s32 %s95, 1
      %p99 = scmp.eq.s32.totalorder %s19, 1
      %p100 = scmp.ne.s32.totalorder %s95, %s97
      %p101 = scmp.eq.s32.totalorder %s19, 0
      %p102 = por %p100, %p101
      %p103 = scmp.ne.s32.totalorder %s95, %s97
      %p104 = scmp.eq.s32.totalorder %s24, 1
      %p105 = por %p103, %p104
      %p106 = scmp.ne.s32.totalorder %s97, %s98
      %p107 = scmp.eq.s32.totalorder %s24, 0
      %p108 = por %p106, %p107
      %p109 = scmp.ne.s32.totalorder %s97, %s98
      %p110 = scmp.eq.s32.totalorder %s25, 1
      %p111 = por %p109, %p110
      %p113 = scmp.ne.s32.totalorder %s98, %s112
      %p114 = scmp.eq.s32.totalorder %s25, 0
      %p115 = por %p113, %p114
      %s117 = sadd.s32 %s116, 1
      %p120 = scmp.eq.s32.totalorder %s19, 1
      %p121 = scmp.ne.s32.totalorder %s116, %s118
      %p122 = scmp.eq.s32.totalorder %s19, 0
      %p123 = por %p121, %p122
      %p124 = scmp.ne.s32.totalorder %s116, %s118
      %p125 = scmp.eq.s32.totalorder %s24, 1
      %p126 = por %p124, %p125
      %p127 = scmp.ne.s32.totalorder %s118, %s119
      %p128 = scmp.eq.s32.totalorder %s24, 0
      %p129 = por %p127, %p128
      %p130 = scmp.ne.s32.totalorder %s118, %s119
      %p131 = scmp.eq.s32.totalorder %s25, 1
      %p132 = por %p130, %p131
      %p134 = scmp.ne.s32.totalorder %s119, %s133
      %p135 = scmp.eq.s32.totalorder %s25, 0
      %p136 = por %p134, %p135
      %s138 = sadd.s32 %s137, 1
      %p141 = scmp.eq.s32.totalorder %s19, 1
      %p142 = scmp.ne.s32.totalorder %s137, %s139
      %p143 = scmp.eq.s32.totalorder %s19, 0
      %p144 = por %p142, %p143
      %p145 = scmp.ne.s32.totalorder %s137, %s139
      %p146 = scmp.eq.s32.totalorder %s24, 1
      %p147 = por %p145, %p146
      %p148 = scmp.ne.s32.totalorder %s139, %s140
      %p149 = scmp.eq.s32.totalorder %s24, 0
      %p150 = por %p148, %p149
      %p151 = scmp.ne.s32.totalorder %s139, %s140
      %p152 = scmp.eq.s32.totalorder %s25, 1
      %p153 = por %p151, %p152
      %p155 = scmp.ne.s32.totalorder %s140, %s154
      %p156 = scmp.eq.s32.totalorder %s25, 0
      %p157 = por %p155, %p156
      %s159 = sadd.s32 %s158, 1
      %p162 = scmp.eq.s32.totalorder %s19, 1
      %p163 = scmp.ne.s32.totalorder %s158, %s160
      %p164 = scmp.eq.s32.totalorder %s19, 0
      %p165 = por %p163, %p164
      %p166 = scmp.ne.s32.totalorder %s158, %s160
      %p167 = scmp.eq.s32.totalorder %s24, 1
      %p168 = por %p166, %p167
      %p169 = scmp.ne.s32.totalorder %s160, %s161
      %p170 = scmp.eq.s32.totalorder %s24, 0
      %p171 = por %p169, %p170
      %p172 = scmp.ne.s32.totalorder %s160, %s161
      %p173 = scmp.eq.s32.totalorder %s25, 1
      %p174 = por %p172, %p173
      %p176 = scmp.ne.s32.totalorder %s161, %s175
      %p177 = scmp.eq.s32.totalorder %s25, 0
      %p178 = por %p176, %p177
      %s180 = sadd.s32 %s179, 1
      %p183 = scmp.eq.s32.totalorder %s19, 1
      %p184 = scmp.ne.s32.totalorder %s179, %s181
      %p185 = scmp.eq.s32.totalorder %s19, 0
      %p186 = por %p184, %p185
      %p187 = scmp.ne.s32.totalorder %s179, %s181
      %p188 = scmp.eq.s32.totalorder %s24, 1
      %p189 = por %p187, %p188
      %p190 = scmp.ne.s32.totalorder %s181, %s182
      %p191 = scmp.eq.s32.totalorder %s24, 0
      %p192 = por %p190, %p191
      %p193 = scmp.ne.s32.totalorder %s181, %s182
      %p194 = scmp.eq.s32.totalorder %s25, 1
      %p195 = por %p193, %p194
      %p197 = scmp.ne.s32.totalorder %s182, %s196
      %p198 = scmp.eq.s32.totalorder %s25, 0
      %p199 = por %p197, %p198
      %s201 = sadd.s32 %s200, 1
      %p204 = scmp.eq.s32.totalorder %s19, 1
      %p205 = scmp.ne.s32.totalorder %s200, %s202
      %p206 = scmp.eq.s32.totalorder %s19, 0
      %p207 = por %p205, %p206
      %p208 = scmp.ne.s32.totalorder %s200, %s202
      %p209 = scmp.eq.s32.totalorder %s24, 1
      %p210 = por %p208, %p209
      %p211 = scmp.ne.s32.totalorder %s202, %s203
      %p212 = scmp.eq.s32.totalorder %s24, 0
      %p213 = por %p211, %p212
      %p214 = scmp.ne.s32.totalorder %s202, %s203
      %p215 = scmp.eq.s32.totalorder %s25, 1
      %p216 = por %p214, %p215
      %p218 = scmp.ne.s32.totalorder %s203, %s217
      %p219 = scmp.eq.s32.totalorder %s25, 0
      %p220 = por %p218, %p219
      %s222 = sadd.s32 %s221, 1
      %p225 = scmp.eq.s32.totalorder %s19, 1
      %p226 = scmp.ne.s32.totalorder %s221, %s223
      %p227 = scmp.eq.s32.totalorder %s19, 0
      %p228 = por %p226, %p227
      %p229 = scmp.ne.s32.totalorder %s221, %s223
      %p230 = scmp.eq.s32.totalorder %s24, 1
      %p231 = por %p229, %p230
      %p232 = scmp.ne.s32.totalorder %s223, %s224
      %p233 = scmp.eq.s32.totalorder %s24, 0
      %p234 = por %p232, %p233
      %p235 = scmp.ne.s32.totalorder %s223, %s224
      %p236 = scmp.eq.s32.totalorder %s25, 1
      %p237 = por %p235, %p236
      %p239 = scmp.ne.s32.totalorder %s224, %s238
      %p240 = scmp.eq.s32.totalorder %s25, 0
      %p241 = por %p239, %p240
      %s242 = ssub.s32 %s19, %s26
      %p243 = scmp.eq.s32.totalorder %s242, 0
      %s245 = sadd.s32 %s244, 1
      %s246 = scalar_select %p243, %s244, %s245
      %p249 = pneg %p243
      %p250 = scmp.eq.s32.totalorder %s19, 1
      %p251 = por %p249, %p250
      %p252 = scmp.ne.s32.totalorder %s244, %s247
      %p253 = scmp.eq.s32.totalorder %s19, 0
      %p254 = por %p252, %p253
      %p255 = scmp.ne.s32.totalorder %s244, %s247
      %p256 = scmp.eq.s32.totalorder %s24, 1
      %p257 = por %p255, %p256
      %p258 = scmp.ne.s32.totalorder %s247, %s248
      %p259 = scmp.eq.s32.totalorder %s24, 0
      %p260 = por %p258, %p259
      %p261 = scmp.ne.s32.totalorder %s247, %s248
      %p262 = scmp.eq.s32.totalorder %s25, 1
      %p263 = por %p261, %p262
      %p265 = scmp.ne.s32.totalorder %s248, %s264
      %p266 = scmp.eq.s32.totalorder %s25, 0
      %p267 = por %p265, %p266
      %p268 = scmp.le.s32.totalorder 1, %s19
      %p269 = scmp.lt.s32.totalorder %s19, 3
      %p270 = pnand %p268, %p269
      %p271 = pneg %p270
      // Predicated region
      $region9: #{tpu_custom_call.1} parent=5 // pred_check
        _
      $region10: #{tpu_custom_call.1} parent=5 // pred_check_branch
        %273 = sbr.rel (%p270) target = $region12
      $region11: #{tpu_custom_call.1} parent=5 // pred_region
        %s274 = ssub.s32 %s19, 1
        // Predicated region
        $region13: #{tpu_custom_call.1} parent=11 // pred_check
          %p275 = pneg %p66
        $region14: #{tpu_custom_call.1} parent=11 // pred_check_branch
          %277 = sbr.rel (%p275) target = $region16
        $region15: #{tpu_custom_call.1} parent=11 // pred_region
          _
        $region16: #{tpu_custom_call.1} parent=11 // pred_fallthru
          _
        // Predicated region
        $region17: #{tpu_custom_call.1} parent=11 // pred_check
          %p278 = pneg %p87
        $region18: #{tpu_custom_call.1} parent=11 // pred_check_branch
          %280 = sbr.rel (%p278) target = $region20
        $region19: #{tpu_custom_call.1} parent=11 // pred_region
          _
        $region20: #{tpu_custom_call.1} parent=11 // pred_fallthru
          _
        // Predicated region
        $region21: #{tpu_custom_call.1} parent=11 // pred_check
          %p281 = pneg %p108
        $region22: #{tpu_custom_call.1} parent=11 // pred_check_branch
          %283 = sbr.rel (%p281) target = $region24
        $region23: #{tpu_custom_call.1} parent=11 // pred_region
          _
        $region24: #{tpu_custom_call.1} parent=11 // pred_fallthru
          _
        // Predicated region
        $region25: #{tpu_custom_call.1} parent=11 // pred_check
          %p284 = pneg %p129
        $region26: #{tpu_custom_call.1} parent=11 // pred_check_branch
          %286 = sbr.rel (%p284) target = $region28
        $region27: #{tpu_custom_call.1} parent=11 // pred_region
          _
        $region28: #{tpu_custom_call.1} parent=11 // pred_fallthru
          _
        // Predicated region
        $region29: #{tpu_custom_call.1} parent=11 // pred_check
          %p287 = pneg %p150
        $region30: #{tpu_custom_call.1} parent=11 // pred_check_branch
          %289 = sbr.rel (%p287) target = $region32
        $region31: #{tpu_custom_call.1} parent=11 // pred_region
          _
        $region32: #{tpu_custom_call.1} parent=11 // pred_fallthru
          _
        // Predicated region
        $region33: #{tpu_custom_call.1} parent=11 // pred_check
          %p290 = pneg %p171
        $region34: #{tpu_custom_call.1} parent=11 // pred_check_branch
          %292 = sbr.rel (%p290) target = $region36
        $region35: #{tpu_custom_call.1} parent=11 // pred_region
          _
        $region36: #{tpu_custom_call.1} parent=11 // pred_fallthru
          _
        // Predicated region
        $region37: #{tpu_custom_call.1} parent=11 // pred_check
          %p293 = pneg %p192
        $region38: #{tpu_custom_call.1} parent=11 // pred_check_branch
          %295 = sbr.rel (%p293) target = $region40
        $region39: #{tpu_custom_call.1} parent=11 // pred_region
          _
        $region40: #{tpu_custom_call.1} parent=11 // pred_fallthru
          _
        // Predicated region
        $region41: #{tpu_custom_call.1} parent=11 // pred_check
          %p296 = pneg %p213
        $region42: #{tpu_custom_call.1} parent=11 // pred_check_branch
          %298 = sbr.rel (%p296) target = $region44
        $region43: #{tpu_custom_call.1} parent=11 // pred_region
          _
        $region44: #{tpu_custom_call.1} parent=11 // pred_fallthru
          _
        // Predicated region
        $region45: #{tpu_custom_call.1} parent=11 // pred_check
          %p299 = pneg %p234
        $region46: #{tpu_custom_call.1} parent=11 // pred_check_branch
          %301 = sbr.rel (%p299) target = $region48
        $region47: #{tpu_custom_call.1} parent=11 // pred_region
          _
        $region48: #{tpu_custom_call.1} parent=11 // pred_fallthru
          _
      $region12: #{tpu_custom_call.1} parent=5 // pred_fallthru
        _
      %p302 = scmp.lt.s32.totalorder %s19, 2
      // Predicated region
      $region49: #{tpu_custom_call.1} parent=5 // pred_check
        %p303 = pneg %p302
      $region50: #{tpu_custom_call.1} parent=5 // pred_check_branch
        %305 = sbr.rel (%p303) target = $region52
      $region51: #{tpu_custom_call.1} parent=5 // pred_region
        // Predicated region
        $region53: #{tpu_custom_call.1} parent=51 // pred_check
          %p306 = pneg %p39
        $region54: #{tpu_custom_call.1} parent=51 // pred_check_branch
          %308 = sbr.rel (%p306) target = $region56
        $region55: #{tpu_custom_call.1} parent=51 // pred_region
          %p309 = scmp.lt.s32.totalorder %s19, 1
          %s310 = scalar_select %p309, %s19, 1
          %s311 = smul.addr %s310, 6
          %s312 = smul.addr %s311, 4
          %s313 = scalar_lea.vmem %s0, %s312
        $region56: #{tpu_custom_call.1} parent=51 // pred_fallthru
          _
      $region52: #{tpu_custom_call.1} parent=5 // pred_fallthru
        _
      %p314 = scmp.le.s32.totalorder 1, %s19
      %p315 = scmp.lt.s32.totalorder %s19, 3
      %p316 = pnand %p314, %p315
      %p317 = pneg %p316
      // Predicated region
      $region57: #{tpu_custom_call.1} parent=5 // pred_check
        _
      $region58: #{tpu_custom_call.1} parent=5 // pred_check_branch
        %319 = sbr.rel (%p316) target = $region60
      $region59: #{tpu_custom_call.1} parent=5 // pred_region
        %s320 = ssub.s32 %s19, 1
        %p321 = scmp.lt.s32.totalorder %s24, 1
        %s322 = scalar_select %p321, %s24, 1
        %s323 = smul.addr %s322, 6
        %s324 = smul.addr %s323, 4
        %s325 = scalar_lea.vmem %s0, %s324
        %p326 = pneg %p45
        %p327 = pneg %p42
        %p328 = pneg %p66
        %p329 = pneg %p63
        %p330 = pneg %p87
        %p331 = pneg %p84
        %p332 = pneg %p108
        %p333 = pneg %p105
        %p334 = pneg %p129
        %p335 = pneg %p126
        %p336 = pneg %p150
        %p337 = pneg %p147
        %p338 = pneg %p171
        %p339 = pneg %p168
        %p340 = pneg %p192
        %p341 = pneg %p189
        %p342 = pneg %p213
        %p343 = pneg %p210
        %p344 = pneg %p234
        %p345 = pneg %p231
        %p346 = pneg %p260
        %p347 = pneg %p257
        %s348 = sand.u32 %s247, 1
        %s349 = scalar_lea.sflag [#allocation4], %s348
        %s350 = sand.u32 %s247, 1
        %s351 = smul.addr %s350, 48
        %s352 = scalar_lea.vmem [#allocation3], %s351
        %p353 = scmp.lt.s32.totalorder %s24, 1
        %s354 = scalar_select %p353, %s24, 1
        %s355 = smul.addr %s354, 6
        %s356 = smul.addr %s355, 4
        %s357 = scalar_lea.vmem %s0, %s356
        %v359 = vld [vmem:[%s357] sm:$0xff]
        %v360 = vld [vmem:[%s357 + $0x8] sm:$0xff]
        %v361 = vld [vmem:[%s357 + $0x10] sm:$0xff]
        %v362 = vld [vmem:[%s1] sm:$0x7]
        %v366 = vunpack.c.l.b16 %v359
        %v367 = vunpack.c.h.b16 %v359
        %v368 = vunpack.c.l.b16 %v360
        %v369 = vunpack.c.h.b16 %v360
        %v370 = vunpack.c.l.b16 %v361
        %v371 = vunpack.c.h.b16 %v361
        %v372 = vpack.c.b16 %v368, %v366
        %v373 = vpack.c.b16 %v369, %v367
        %v374 = vpack.c.b16 %v370, %v370
        %v375 = vpack.c.b16 %v371, %v371
        %vm378 = vcmask 195584
        %v380 = vsel %vm378, %v362, 0
        %vm382 = vcmask 1043456
        %v384 = vsel %vm382, %v374, 0
        %v387 = vsel %vm382, %v375, 0
        %389 = vmatprep.subr.bf16.mxu0 %v373
        %390 = vmatpush1.bf16.msra.mxu0 %v372
        %391 = vmatprep.subr.bf16.mxu0 %v387
        %392 = vmatpush1.bf16.msra.mxu0 %v384
        %393 = vmatprep.subr.bf16.mxu0 0
        %394 = vmatpush1.bf16.msra.mxu0 0
        %395 = vmatprep.subr.bf16.mxu0 0
        %396 = vmatpush1.bf16.msra.mxu0 0
        %397 = vmatprep.subr.bf16.mxu0 0
        %398 = vmatpush1.bf16.msra.mxu0 0
        %399 = vmatprep.subr.bf16.mxu0 0
        %400 = vmatpush1.bf16.msra.mxu0 0
        %401 = vmatprep.subr.bf16.mxu0 0
        %402 = vmatpush1.bf16.msra.mxu0 0
        %403 = vmatprep.subr.bf16.mxu0 0
        %404 = vmatpush1.bf16.msra.mxu0 0
        %405 = vmatprep.subr.bf16.mxu0 0
        %406 = vmatpush1.bf16.msra.mxu0 0
        %407 = vmatprep.subr.bf16.mxu0 0
        %408 = vmatpush1.bf16.msra.mxu0 0
        %409 = vmatprep.subr.bf16.mxu0 0
        %410 = vmatpush1.bf16.msra.mxu0 0
        %411 = vmatprep.subr.bf16.mxu0 0
        %412 = vmatpush1.bf16.msra.mxu0 0
        %413 = vmatprep.subr.bf16.mxu0 0
        %414 = vmatpush1.bf16.msra.mxu0 0
        %415 = vmatprep.subr.bf16.mxu0 0
        %416 = vmatpush1.bf16.msra.mxu0 0
        %417 = vmatprep.subr.bf16.mxu0 0
        %418 = vmatpush1.bf16.msra.mxu0 0
        %419 = vmatprep.subr.bf16.mxu0 0
        %420 = vmatpush1.bf16.msra.mxu0 0
        %421 = vmatprep.mubr.bf16.mxu0 0
        %422 = vmatmul.mubr.bf16.gmra.mrb[0].mxu0 %v380
        %v423 = vpop.f32.mrb[0].mxu0
        %v424 = vadd.f32 0.0, %v423
        %v425 = vpop.f32.mrb[0].mxu0
        %v426 = vadd.f32 0.0, %v425
        %v427 = vpop.f32.mrb[0].mxu0
        %v428 = vpop.f32.mrb[0].mxu0
        %429 = vdwg.mxu0
        %v430 = vld [vmem:[%s2] sm:$0x3f]
        %432 = vset.pattern.permute.xlu0 0
        %433 = vperm.xlu0 %432, %v430
        %v434 = vpop.permute.xlu0 %433
        %v436 = vmul.f32 %v424, %v434
        %v437 = vmul.f32 %v426, %v434
        %v438 = vld [vmem:[%s3] sm:$0x3f]
        %440 = vset.pattern.permute.xlu0 0
        %441 = vperm.xlu0 %440, %v438
        %v442 = vpop.permute.xlu0 %441
        %v444 = vadd.f32 %v436, %v442
        %v445 = vadd.f32 %v437, %v442
        %v446 = vmax.f32 %v444, 0.0
        %v447 = vmax.f32 %v445, 0.0
        %448 = vst [vmem:[#allocation2] sm:$0x3f] 0.0
        %449 = vst [vmem:[#allocation2 + $0x8] sm:$0x3f] 0.0
        %vm450 = vcmask 275456
        %451 = vst.msk [vmem:[#allocation2 + $0x10] sm:$0x3f] %vm450, 0.0
        %454 = vrot.lane.b32.xlu0 %v446, 17
        %v455 = vpop.permute.xlu0 %454
        %456 = vrot.lane.b32.xlu0 %v447, 17
        %v457 = vpop.permute.xlu0 %456
        %vm458 = vcmask 138240
        %v459 = vsel %vm458, %v455, %v457
        %vm463 = vcmask 1045640
        %464 = vst.msk [vmem:[#allocation2] sm:$0x3f] %vm463, %v455
        %465 = vst [vmem:[#allocation2 + $0x8] sm:$0x3f] %v459
        %vm466 = vcmask 136192
        %467 = vst.msk [vmem:[#allocation2 + $0x10] sm:$0x3f] %vm466, %v457
        %v468 = vlaneseq
        %v469 = vand.u32 %v468, 127
        %v470 = vadd.s32 %v469, 128
        %vm471 = vcmp.lt.s32.totalorder %v469, 0
        %v472 = vsub.s32 0, %v469
        %v473 = vsel %vm471, %v472, %v469
        %v474 = vshrl.u32 %v473, 4
        %v475 = vand.u32 %v473, 15
        %v476 = vsub.s32 0, %v475
        %v477 = vsel %vm471, %v476, %v475
        %vm478 = vcmp.lt.s32.totalorder %v470, 0
        %v479 = vsub.s32 0, %v470
        %v480 = vsel %vm478, %v479, %v470
        %v481 = vshrl.u32 %v480, 4
        %v482 = vand.u32 %v480, 15
        %v483 = vsub.s32 0, %v482
        %v484 = vsel %vm478, %v483, %v482
        %vm485 = vcmp.ne.s32.totalorder %v477, 0
        %vm486 = vcmp.ne.s32.totalorder %v484, 0
        %vm487 = vcmp.lt.s32.totalorder %v477, 0
        %vm488 = vcmp.lt.s32.totalorder %v484, 0
        %vm489 = vmand %vm487, %vm485
        %vm490 = vmand %vm488, %vm486
        %v491 = vadd.s32 %v477, 16
        %v492 = vadd.s32 %v484, 16
        %v493 = vsel %vm489, %v491, %v477
        %v494 = vsel %vm490, %v492, %v484
        %vm495 = vcmp.ge.s32.totalorder %v493, 1
        %vm496 = vcmp.ge.s32.totalorder %v494, 1
        %vm497 = vcmp.lt.s32.totalorder %v493, 15
        %vm498 = vcmp.lt.s32.totalorder %v494, 15
        %v499 = vld [vmem:[#allocation2] sm:$0x3f]
        %v500 = vld [vmem:[#allocation2 + $0x8] sm:$0x3f]
        %v501 = vsel %vm495, %v499, 0.0
        %v502 = vsel %vm496, %v500, 0.0
        %v503 = vld [vmem:[%s4] sm:$0x3f]
        %505 = vset.pattern.permute.xlu0 0
        %506 = vperm.xlu0 %505, %v503
        %v507 = vpop.permute.xlu0 %506
        %v509 = vmul.f32 %v501, %v507
        %v510 = vmul.f32 %v502, %v507
        %v511 = vadd.f32 %v509, 0.0
        %v512 = vadd.f32 %v510, 0.0
        %v513 = vld [vmem:[#allocation2] sm:$0x3f]
        %v514 = vld [vmem:[#allocation2 + $0x8] sm:$0x3f]
        %v515 = vld [vmem:[#allocation2 + $0x10] sm:$0x3f]
        %516 = vset.pattern.permute.xlu0 1
        %517 = vperm.xlu0 %516, %v503
        %v518 = vpop.permute.xlu0 %517
        %v520 = vmul.f32 %v513, %v518
        %v521 = vmul.f32 %v514, %v518
        %v522 = vmul.f32 %v515, %v518
        %526 = vrot.lane.b32.xlu0 %v520, 127
        %v527 = vpop.permute.xlu0 %526
        %528 = vrot.lane.b32.xlu0 %v521, 127
        %v529 = vpop.permute.xlu0 %528
        %530 = vrot.lane.b32.xlu0 %v522, 127
        %v531 = vpop.permute.xlu0 %530
        %vm532 = vcmask 1039360
        %v533 = vsel %vm532, %v527, %v529
        %v534 = vsel %vm532, %v529, %v531
        %v537 = vadd.f32 %v511, %v533
        %v538 = vadd.f32 %v512, %v534
        %542 = vrot.lane.b32.xlu0 %v513, 126
        %v543 = vpop.permute.xlu0 %542
        %544 = vrot.lane.b32.xlu0 %v514, 126
        %v545 = vpop.permute.xlu0 %544
        %546 = vrot.lane.b32.xlu0 %v515, 126
        %v547 = vpop.permute.xlu0 %546
        %vm548 = vcmask 1031168
        %v549 = vsel %vm548, %v543, %v545
        %v550 = vsel %vm548, %v545, %v547
        %v553 = vsel %vm497, %v549, 0.0
        %v554 = vsel %vm498, %v550, 0.0
        %555 = vset.pattern.permute.xlu0 2
        %556 = vperm.xlu0 %555, %v503
        %v557 = vpop.permute.xlu0 %556
        %v559 = vmul.f32 %v553, %v557
        %v560 = vmul.f32 %v554, %v557
        %v561 = vadd.f32 %v537, %v559
        %v562 = vadd.f32 %v538, %v560
        %563 = vrot.lane.b32.xlu0 %v513, 112
        %v564 = vpop.permute.xlu0 %563
        %565 = vrot.lane.b32.xlu0 %v514, 112
        %v566 = vpop.permute.xlu0 %565
        %567 = vrot.lane.b32.xlu0 %v515, 112
        %v568 = vpop.permute.xlu0 %567
        %vm569 = vcmask 916480
        %v570 = vsel %vm569, %v564, %v566
        %v571 = vsel %vm569, %v566, %v568
        %v574 = vsel %vm495, %v570, 0.0
        %v575 = vsel %vm496, %v571, 0.0
        %576 = vset.pattern.permute.xlu0 3
        %577 = vperm.xlu0 %576, %v503
        %v578 = vpop.permute.xlu0 %577
        %v580 = vmul.f32 %v574, %v578
        %v581 = vmul.f32 %v575, %v578
        %v582 = vadd.f32 %v561, %v580
        %v583 = vadd.f32 %v562, %v581
        %584 = vset.pattern.permute.xlu0 4
        %585 = vperm.xlu0 %584, %v503
        %v586 = vpop.permute.xlu0 %585
        %v588 = vmul.f32 %v513, %v586
        %v589 = vmul.f32 %v514, %v586
        %v590 = vmul.f32 %v515, %v586
        %594 = vrot.lane.b32.xlu0 %v588, 111
        %v595 = vpop.permute.xlu0 %594
        %596 = vrot.lane.b32.xlu0 %v589, 111
        %v597 = vpop.permute.xlu0 %596
        %598 = vrot.lane.b32.xlu0 %v590, 111
        %v599 = vpop.permute.xlu0 %598
        %vm600 = vcmask 908288
        %v601 = vsel %vm600, %v595, %v597
        %v602 = vsel %vm600, %v597, %v599
        %v605 = vadd.f32 %v582, %v601
        %v606 = vadd.f32 %v583, %v602
        %607 = vrot.lane.b32.xlu0 %v513, 110
        %v608 = vpop.permute.xlu0 %607
        %609 = vrot.lane.b32.xlu0 %v514, 110
        %v610 = vpop.permute.xlu0 %609
        %611 = vrot.lane.b32.xlu0 %v515, 110
        %v612 = vpop.permute.xlu0 %611
        %vm613 = vcmask 900096
        %v614 = vsel %vm613, %v608, %v610
        %v615 = vsel %vm613, %v610, %v612
        %v618 = vsel %vm497, %v614, 0.0
        %v619 = vsel %vm498, %v615, 0.0
        %620 = vset.pattern.permute.xlu0 5
        %621 = vperm.xlu0 %620, %v503
        %v622 = vpop.permute.xlu0 %621
        %v624 = vmul.f32 %v618, %v622
        %v625 = vmul.f32 %v619, %v622
        %v626 = vadd.f32 %v605, %v624
        %v627 = vadd.f32 %v606, %v625
        %628 = vrot.lane.b32.xlu0 %v513, 96
        %v629 = vpop.permute.xlu0 %628
        %630 = vrot.lane.b32.xlu0 %v514, 96
        %v631 = vpop.permute.xlu0 %630
        %632 = vrot.lane.b32.xlu0 %v515, 96
        %v633 = vpop.permute.xlu0 %632
        %vm634 = vcmask 785408
        %v635 = vsel %vm634, %v629, %v631
        %v636 = vsel %vm634, %v631, %v633
        %v639 = vsel %vm495, %v635, 0.0
        %v640 = vsel %vm496, %v636, 0.0
        %641 = vset.pattern.permute.xlu0 6
        %642 = vperm.xlu0 %641, %v503
        %v643 = vpop.permute.xlu0 %642
        %v645 = vmul.f32 %v639, %v643
        %v646 = vmul.f32 %v640, %v643
        %v647 = vadd.f32 %v626, %v645
        %v648 = vadd.f32 %v627, %v646
        %649 = vset.pattern.permute.xlu0 7
        %650 = vperm.xlu0 %649, %v503
        %v651 = vpop.permute.xlu0 %650
        %v653 = vmul.f32 %v513, %v651
        %v654 = vmul.f32 %v514, %v651
        %v655 = vmul.f32 %v515, %v651
        %659 = vrot.lane.b32.xlu0 %v653, 95
        %v660 = vpop.permute.xlu0 %659
        %661 = vrot.lane.b32.xlu0 %v654, 95
        %v662 = vpop.permute.xlu0 %661
        %663 = vrot.lane.b32.xlu0 %v655, 95
        %v664 = vpop.permute.xlu0 %663
        %vm665 = vcmask 777216
        %v666 = vsel %vm665, %v660, %v662
        %v667 = vsel %vm665, %v662, %v664
        %v670 = vadd.f32 %v647, %v666
        %v671 = vadd.f32 %v648, %v667
        %672 = vrot.lane.b32.xlu0 %v513, 94
        %v673 = vpop.permute.xlu0 %672
        %674 = vrot.lane.b32.xlu0 %v514, 94
        %v675 = vpop.permute.xlu0 %674
        %676 = vrot.lane.b32.xlu0 %v515, 94
        %v677 = vpop.permute.xlu0 %676
        %vm678 = vcmask 769024
        %v679 = vsel %vm678, %v673, %v675
        %v680 = vsel %vm678, %v675, %v677
        %v683 = vsel %vm497, %v679, 0.0
        %v684 = vsel %vm498, %v680, 0.0
        %685 = vset.pattern.permute.xlu0 8
        %686 = vperm.xlu0 %685, %v503
        %v687 = vpop.permute.xlu0 %686
        %v689 = vmul.f32 %v683, %v687
        %v690 = vmul.f32 %v684, %v687
        %v691 = vadd.f32 %v670, %v689
        %v692 = vadd.f32 %v671, %v690
        %v693 = vld [vmem:[%s5] sm:$0x3f]
        %695 = vset.pattern.permute.xlu0 0
        %696 = vperm.xlu0 %695, %v693
        %v697 = vpop.permute.xlu0 %696
        %v699 = vmul.f32 %v691, %v697
        %v700 = vmul.f32 %v692, %v697
        %v701 = vld [vmem:[%s6] sm:$0x3f]
        %703 = vset.pattern.permute.xlu0 0
        %704 = vperm.xlu0 %703, %v701
        %v705 = vpop.permute.xlu0 %704
        %v707 = vadd.f32 %v699, %v705
        %v708 = vadd.f32 %v700, %v705
        %v709 = vld [vmem:[%s7] sm:$0xf]
        %v710 = vld [vmem:[%s7 + $0x4] sm:$0xf]
        %v711 = vld [vmem:[%s7 + $0x8] sm:$0xf]
        %v712 = vpack.c.bf16 %v707, %v707
        %v713 = vpack.c.bf16 %v708, %v708
        %v717 = vunpack.c.l.b16 %v709
        %v718 = vunpack.c.l.b16 %v710
        %v719 = vunpack.c.l.b16 %v711
        %v720 = vpack.c.b16 %v718, %v717
        %v721 = vpack.c.b16 %v719, %v719
        %vm722 = vcmask 48128
        %v724 = vsel %vm722, %v720, 0
        %v727 = vsel %vm722, %v721, 0
        %vm729 = vcmask 1042432
        %v731 = vsel %vm729, %v712, 0
        %v734 = vsel %vm729, %v713, 0
        %736 = vmatprep.subr.bf16.mxu0 %v734
        %737 = vmatpush1.bf16.msra.mxu0 %v731
        %738 = vmatprep.subr.bf16.mxu0 0
        %739 = vmatpush1.bf16.msra.mxu0 0
        %740 = vmatprep.subr.bf16.mxu0 0
        %741 = vmatpush1.bf16.msra.mxu0 0
        %742 = vmatprep.subr.bf16.mxu0 0
        %743 = vmatpush1.bf16.msra.mxu0 0
        %744 = vmatprep.subr.bf16.mxu0 0
        %745 = vmatpush1.bf16.msra.mxu0 0
        %746 = vmatprep.subr.bf16.mxu0 0
        %747 = vmatpush1.bf16.msra.mxu0 0
        %748 = vmatprep.subr.bf16.mxu0 0
        %749 = vmatpush1.bf16.msra.mxu0 0
        %750 = vmatprep.subr.bf16.mxu0 0
        %751 = vmatpush1.bf16.msra.mxu0 0
        %752 = vmatprep.subr.bf16.mxu0 0
        %753 = vmatpush1.bf16.msra.mxu0 0
        %754 = vmatprep.subr.bf16.mxu0 0
        %755 = vmatpush1.bf16.msra.mxu0 0
        %756 = vmatprep.subr.bf16.mxu0 0
        %757 = vmatpush1.bf16.msra.mxu0 0
        %758 = vmatprep.subr.bf16.mxu0 0
        %759 = vmatpush1.bf16.msra.mxu0 0
        %760 = vmatprep.subr.bf16.mxu0 0
        %761 = vmatpush1.bf16.msra.mxu0 0
        %762 = vmatprep.subr.bf16.mxu0 0
        %763 = vmatpush1.bf16.msra.mxu0 0
        %764 = vmatprep.subr.bf16.mxu0 0
        %765 = vmatpush1.bf16.msra.mxu0 0
        %766 = vmatprep.subr.bf16.mxu0 0
        %767 = vmatpush1.bf16.msra.mxu0 0
        %768 = vmatprep.mubr.bf16.mxu0 0
        %769 = vmatmul.mubr.bf16.gmra.mrb[0].mxu0 %v724
        %v770 = vpop.f32.mrb[0].mxu0
        %v771 = vadd.f32 0.0, %v770
        %v772 = vpop.f32.mrb[0].mxu0
        %v773 = vadd.f32 0.0, %v772
        %v774 = vpop.f32.mrb[0].mxu0
        %v775 = vadd.f32 0.0, %v774
        %v776 = vpop.f32.mrb[0].mxu0
        %v777 = vadd.f32 0.0, %v776
        %778 = vmatprep.mubr.bf16.mxu0 0
        %779 = vmatmul.mubr.bf16.gmra.mrb[0].mxu0 %v727
        %v780 = vpop.f32.mrb[0].mxu0
        %v781 = vadd.f32 0.0, %v780
        %v782 = vpop.f32.mrb[0].mxu0
        %v783 = vadd.f32 0.0, %v782
        %v784 = vpop.f32.mrb[0].mxu0
        %v785 = vpop.f32.mrb[0].mxu0
        %786 = vdwg.mxu0
        %v787 = vld [vmem:[%s8] sm:$0xff]
        %v788 = vld [vmem:[%s8 + $0x8] sm:$0xff]
        %v789 = vld [vmem:[%s8 + $0x10] sm:$0xff]
        %791 = vset.pattern.permute.xlu0 0
        %792 = vperm.xlu0 %791, %v787
        %v793 = vpop.permute.xlu0 %792
        %796 = vset.pattern.permute.xlu0 0
        %797 = vperm.xlu0 %796, %v788
        %v798 = vpop.permute.xlu0 %797
        %801 = vset.pattern.permute.xlu0 0
        %802 = vperm.xlu0 %801, %v789
        %v803 = vpop.permute.xlu0 %802
        %v805 = vmul.f32 %v771, %v793
        %v806 = vmul.f32 %v773, %v793
        %v807 = vmul.f32 %v775, %v798
        %v808 = vmul.f32 %v777, %v798
        %v809 = vmul.f32 %v781, %v803
        %v810 = vmul.f32 %v783, %v803
        %v811 = vld [vmem:[%s9] sm:$0xff]
        %v812 = vld [vmem:[%s9 + $0x8] sm:$0xff]
        %v813 = vld [vmem:[%s9 + $0x10] sm:$0xff]
        %815 = vset.pattern.permute.xlu0 0
        %816 = vperm.xlu0 %815, %v811
        %v817 = vpop.permute.xlu0 %816
        %820 = vset.pattern.permute.xlu0 0
        %821 = vperm.xlu0 %820, %v812
        %v822 = vpop.permute.xlu0 %821
        %825 = vset.pattern.permute.xlu0 0
        %826 = vperm.xlu0 %825, %v813
        %v827 = vpop.permute.xlu0 %826
        %v829 = vadd.f32 %v805, %v817
        %v830 = vadd.f32 %v806, %v817
        %v831 = vadd.f32 %v807, %v822
        %v832 = vadd.f32 %v808, %v822
        %v833 = vadd.f32 %v809, %v827
        %v834 = vadd.f32 %v810, %v827
        %v835 = vunpack.c.l.bf16 %v359
        %v836 = vunpack.c.h.bf16 %v359
        %v837 = vunpack.c.l.bf16 %v360
        %v838 = vunpack.c.h.bf16 %v360
        %v839 = vunpack.c.l.bf16 %v361
        %v840 = vunpack.c.h.bf16 %v361
        %v841 = vadd.f32 %v829, %v835
        %v842 = vadd.f32 %v830, %v836
        %v843 = vadd.f32 %v831, %v837
        %v844 = vadd.f32 %v832, %v838
        %v845 = vadd.f32 %v833, %v839
        %v846 = vadd.f32 %v834, %v840
        %v847 = vmax.f32 %v841, 0.0
        %v848 = vmax.f32 %v842, 0.0
        %v849 = vmax.f32 %v843, 0.0
        %v850 = vmax.f32 %v844, 0.0
        %v851 = vmax.f32 %v845, 0.0
        %v852 = vmax.f32 %v846, 0.0
        %853 = vst [vmem:[%s352] sm:$0xff] %v847
        %854 = vst [vmem:[%s352 + $0x8] sm:$0xff] %v848
        %855 = vst [vmem:[%s352 + $0x10] sm:$0xff] %v849
        %856 = vst [vmem:[%s352 + $0x18] sm:$0xff] %v850
        %857 = vst [vmem:[%s352 + $0x20] sm:$0xff] %v851
        %858 = vst [vmem:[%s352 + $0x28] sm:$0xff] %v852
        %s859 = sand.u32 %s247, 1
        %s860 = scalar_lea.sflag [#allocation4], %s859
        %s861 = sand.u32 %s247, 1
        %s862 = smul.addr %s861, 48
        %s863 = scalar_lea.vmem [#allocation3], %s862
        // Predicated region
        $region61: #{tpu_custom_call.1} parent=59 // pred_check
          %p864 = pneg %p257
        $region62: #{tpu_custom_call.1} parent=59 // pred_check_branch
          %866 = sbr.rel (%p864) target = $region64
        $region63: #{tpu_custom_call.1} parent=59 // pred_region
          %s868 = ssub.s32 768, 768
          %869 = vsyncadd %s860, %s868
          %s870 = smul.addr %s24, 6
          %s871 = smul.addr %s870, 128
          %s872 = scalar_lea.hbm %s10, %s871
          %s873 = sshll.u32 %s863, 4
          %s874 = int_to_ptr.vmem [resolvable:$true] %s873
          %879 = dma.vmem_to_hbm [thread:$0]  %s874, 768, %s872, %s860, 256, 256, 16
        $region64: #{tpu_custom_call.1} parent=59 // pred_fallthru
          _
      $region60: #{tpu_custom_call.1} parent=5 // pred_fallthru
        _
      %p880 = scmp.le.s32.totalorder 2, %s19
      // Predicated region
      $region65: #{tpu_custom_call.1} parent=5 // pred_check
        %p881 = pneg %p880
      $region66: #{tpu_custom_call.1} parent=5 // pred_check_branch
        %883 = sbr.rel (%p881) target = $region68
      $region67: #{tpu_custom_call.1} parent=5 // pred_region
        %s884 = ssub.s32 %s19, 2
        // Predicated region
        $region69: #{tpu_custom_call.1} parent=67 // pred_check
          %p885 = pneg %p263
        $region70: #{tpu_custom_call.1} parent=67 // pred_check_branch
          %887 = sbr.rel (%p885) target = $region72
        $region71: #{tpu_custom_call.1} parent=67 // pred_region
          %s888 = sand.u32 %s248, 1
          %s889 = scalar_lea.sflag [#allocation4], %s888
          %s890 = sand.u32 %s248, 1
          %s891 = smul.addr %s890, 48
          %s892 = scalar_lea.vmem [#allocation3], %s891
          %893 = dma.done %s889, 768
        $region72: #{tpu_custom_call.1} parent=67 // pred_fallthru
          _
      $region68: #{tpu_custom_call.1} parent=5 // pred_fallthru
        _
    $region6: #{tpu_custom_call.1} parent=1 // loop_footer
      %s23 = sadd.s32 1, %s19
    $region7: #{tpu_custom_call.1} parent=1 // loop_footer_branch
      %18 = sbr.rel target = $region3
    $region8: #{tpu_custom_call.1} parent=1 // loop_exit
      _
    %894 = vsyncpa [#allocation4], 1
    %s895 = scalar_lea.sflag [#allocation4], 1
    %896 = vsyncpa %s895, 1

</llo_original>
